<compile_context>
chip_gen: v7x
topology: tpu7x:2x2x1
jax: 0.10.0
libtpu: 0.0.40
codegen_flags: <defaults>
</compile_context>

<pallas_src>
import functools

import jax
import jax.numpy as jnp
import numpy as np
from jax import lax
from jax.experimental import pallas as pl
from jax.experimental.pallas import tpu as pltpu

EPS = 1e-5
LANES = 128


# ----------------------------------------------------------------------------- kernel
def down_kernel(x_ref, w1_ref, s1_ref, b1_ref, mask_ref, w2_ref, s2_ref, b2_ref, o_ref):
    """One grid step: M = NB*Hp*Wp output pixels, each conv is a single MXU pass."""
    M = x_ref.shape[0]
    HW, CP = mask_ref.shape
    NB = M // HW

    # conv1 evaluated at all 9 taps conv2 will read (compact K = 25*Cin -> 128):
    # one (M,128)@(128,128) bf16 matmul, f32 accumulation.
    a1 = jnp.dot(x_ref[...], w1_ref[...], preferred_element_type=jnp.float32)   # (M,128) f32
    h1 = jnp.maximum(a1 * s1_ref[...] + b1_ref[...], 0.0)        # fused conv-bias+BN, ReLU
    # zero tap groups whose source pixel is off-image (= conv2's SAME zero padding)
    h1 = (h1.reshape(NB, HW, CP) * mask_ref[...]).reshape(M, CP)

    # conv2 on the compact patch matrix (K = 9*C1 -> 128): one bf16 MXU pass.
    a2 = jnp.dot(h1.astype(jnp.bfloat16), w2_ref[...], preferred_element_type=jnp.float32)
    o_ref[...] = jnp.maximum(a2 * s2_ref[...] + b2_ref[...], 0.0)


# ----------------------------------------------------------------- one-time param prep
def _fold_bn(conv_bias, gamma, beta, mean, var):
    scale = np.asarray(gamma, np.float32) / np.sqrt(np.asarray(var, np.float32) + EPS)
    shift = (np.asarray(conv_bias, np.float32) - np.asarray(mean, np.float32)) * scale \
            + np.asarray(beta, np.float32)
    return scale, shift


def prepare_down_params(p, H, W):
    """Hoisted, numpy-only prep: im2col mega-weights, folded BN, SAME-pad mask."""
    w1 = np.asarray(p["w1"], np.float32)          # (3,3,Cin,C1)  HWIO
    w2 = np.asarray(p["w2"], np.float32)          # (3,3,C1,C2)
    Cin, C1 = w1.shape[2], w1.shape[3]
    C2 = w2.shape[3]
    Hp, Wp = H // 2, W // 2
    HW = Hp * Wp
    assert 25 * Cin <= LANES, "conv1 im2col K (25*Cin) must fit in 128 lanes"
    assert 9 * C1 <= LANES and C2 <= LANES, "conv2 K (9*C1) and C2 must fit in 128 lanes"

    # conv1 mega-weight: rows = flattened 5x5xCin patch centred at the OUTPUT pixel,
    # cols = conv1 activations at the 9 positions conv2's 3x3 window reads
    # (tap t = dy*3+dx -> lanes [t*C1, (t+1)*C1)).
    w1big = np.zeros((LANES, LANES), np.float32)
    for dy in range(3):
        for dx in range(3):
            t = dy * 3 + dx
            for ky in range(3):
                for kx in range(3):
                    ey, ex = dy + ky, dx + kx            # position inside the 5x5 patch
                    r0 = (ey * 5 + ex) * Cin
                    w1big[r0:r0 + Cin, t * C1:(t + 1) * C1] = w1[ky, kx]

    # conv2 compact weight: rows = (tap, c1), cols = c2.
    w2c = np.zeros((LANES, LANES), np.float32)
    for dy in range(3):
        for dx in range(3):
            t = dy * 3 + dx
            w2c[t * C1:(t + 1) * C1, :C2] = w2[dy, dx]

    # folded (conv bias + eval-mode BN) scale/shift, tiled to the lane layouts above.
    sc1, sh1 = _fold_bn(p["b1"], p["g1"], p["beta1"], p["m1"], p["v1"])
    sc2, sh2 = _fold_bn(p["b2"], p["g2"], p["beta2"], p["m2"], p["v2"])
    s1t = np.zeros((1, LANES), np.float32)
    b1t = np.zeros((1, LANES), np.float32)
    for t in range(9):
        s1t[0, t * C1:(t + 1) * C1] = sc1
        b1t[0, t * C1:(t + 1) * C1] = sh1
    s2p = np.zeros((1, LANES), np.float32)
    b2p = np.zeros((1, LANES), np.float32)
    s2p[0, :C2] = sc2
    b2p[0, :C2] = sh2

    # 0/1 mask: zero the tap groups whose source pixel (y+dy-1, x+dx-1) is off-image.
    mask = np.zeros((HW, LANES), np.float32)
    ys, xs = np.arange(Hp)[:, None], np.arange(Wp)[None, :]
    for dy in range(3):
        for dx in range(3):
            t = dy * 3 + dx
            ok = ((ys + dy - 1 >= 0) & (ys + dy - 1 < Hp) &
                  (xs + dx - 1 >= 0) & (xs + dx - 1 < Wp)).astype(np.float32)
            mask[:, t * C1:(t + 1) * C1] = ok.reshape(HW, 1)

    return {
        "w1big": jnp.asarray(w1big, jnp.bfloat16),
        "w2c": jnp.asarray(w2c, jnp.bfloat16),
        "s1t": jnp.asarray(s1t), "b1t": jnp.asarray(b1t),
        "s2p": jnp.asarray(s2p), "b2p": jnp.asarray(b2p),
        "mask": jnp.asarray(mask),
    }


# ----------------------------------------------------------------------------- forward
@functools.partial(jax.jit, static_argnames=("c_out",))
def down_forward(x_nchw, prep, *, c_out):
    """x_nchw: (N, Cin, H, W) float32 -> (N, c_out, H//2, W//2) float32."""
    N, Cin, H, W = x_nchw.shape
    Hp, Wp = H // 2, W // 2
    HW = Hp * Wp
    K1 = 25 * Cin

    # layout glue: NCHW -> NHWC, MaxPool2d(2), 5x5 im2col (2-pixel zero halo),
    # pad K to 128 lanes, bf16 cast for the MXU.
    x = jnp.transpose(x_nchw, (0, 2, 3, 1))
    pooled = lax.reduce_window(x, -jnp.inf, lax.max, (1, 2, 2, 1), (1, 2, 2, 1), "VALID")
    padded = jnp.pad(pooled, ((0, 0), (2, 2), (2, 2), (0, 0)))
    taps = [padded[:, ey:ey + Hp, ex:ex + Wp, :] for ey in range(5) for ex in range(5)]
    x5 = jnp.concatenate(taps, axis=-1)                                # (N,Hp,Wp,25*Cin)
    x5 = jnp.pad(x5, ((0, 0), (0, 0), (0, 0), (0, LANES - K1))).astype(jnp.bfloat16)
    x5 = x5.reshape(N * HW, LANES)                                     # lane-dense rows

    # Keep >=2 "parallel" grid steps when N is even so both v7x TensorCores get work.
    # (On 1-TC v5e/v6e a single step with M = N*HW would also be fine.)
    n_steps = 2 if (N % 2 == 0 and N >= 2) else 1
    M = (N // n_steps) * HW
    assert M % 8 == 0, "rows per step must be a multiple of 8 sublanes"

    out_flat = pl.pallas_call(
        down_kernel,
        out_shape=jax.ShapeDtypeStruct((N * HW, LANES), jnp.float32),
        grid_spec=pltpu.PrefetchScalarGridSpec(
            num_scalar_prefetch=0,
            grid=(n_steps,),
            in_specs=[
                pl.BlockSpec((M, LANES), lambda n: (n, 0)),       # conv1 im2col rows
                pl.BlockSpec((LANES, LANES), lambda n: (0, 0)),   # w1 mega-weight
                pl.BlockSpec((1, LANES), lambda n: (0, 0)),       # scale1 (tiled)
                pl.BlockSpec((1, LANES), lambda n: (0, 0)),       # shift1 (tiled)
                pl.BlockSpec((HW, LANES), lambda n: (0, 0)),      # SAME-pad mask
                pl.BlockSpec((LANES, LANES), lambda n: (0, 0)),   # w2 compact
                pl.BlockSpec((1, LANES), lambda n: (0, 0)),       # scale2
                pl.BlockSpec((1, LANES), lambda n: (0, 0)),       # shift2
            ],
            out_specs=pl.BlockSpec((M, LANES), lambda n: (n, 0)),
        ),
        compiler_params=pltpu.CompilerParams(
            dimension_semantics=("parallel",),
            vmem_limit_bytes=16 * 1024 * 1024),
    )(x5, prep["w1big"], prep["s1t"], prep["b1t"], prep["mask"],
      prep["w2c"], prep["s2p"], prep["b2p"])

    out = out_flat.reshape(N, Hp, Wp, LANES)[..., :c_out]
    return jnp.transpose(out, (0, 3, 1, 2))


# --------------------------------------------------------------------------- reference
def ref_down(x_nchw, p):
    """Pure-JAX reference (eval-mode BN), NCHW in / NCHW out."""
    x = jnp.transpose(x_nchw, (0, 2, 3, 1))
    x = lax.reduce_window(x, -jnp.inf, lax.max, (1, 2, 2, 1), (1, 2, 2, 1), "VALID")

    def conv_bn_relu(x, w, b, g, beta, mean, var):
        y = lax.conv_general_dilated(
            x, w, (1, 1), "SAME",
            dimension_numbers=("NHWC", "HWIO", "NHWC"),
            precision=lax.Precision.HIGHEST)
        y = y + b
        y = (y - mean) / jnp.sqrt(var + EPS) * g + beta
        return jnp.maximum(y, 0.0)

    x = conv_bn_relu(x, p["w1"], p["b1"], p["g1"], p["beta1"], p["m1"], p["v1"])
    x = conv_bn_relu(x, p["w2"], p["b2"], p["g2"], p["beta2"], p["m2"], p["v2"])
    return jnp.transpose(x, (0, 3, 1, 2))


def make_params(key, cin, c1, c2):
    ks = jax.random.split(key, 12)
    return {
        "w1": jax.random.normal(ks[0], (3, 3, cin, c1), jnp.float32) * 0.15,
        "b1": jax.random.normal(ks[1], (c1,), jnp.float32) * 0.1,
        "g1": 1.0 + 0.1 * jax.random.normal(ks[2], (c1,), jnp.float32),
        "beta1": 0.1 * jax.random.normal(ks[3], (c1,), jnp.float32),
        "m1": 0.05 * jax.random.normal(ks[4], (c1,), jnp.float32),
        "v1": jax.random.uniform(ks[5], (c1,), jnp.float32, 0.5, 1.5),
        "w2": jax.random.normal(ks[6], (3, 3, c1, c2), jnp.float32) * 0.1,
        "b2": jax.random.normal(ks[7], (c2,), jnp.float32) * 0.1,
        "g2": 1.0 + 0.1 * jax.random.normal(ks[8], (c2,), jnp.float32),
        "beta2": 0.1 * jax.random.normal(ks[9], (c2,), jnp.float32),
        "m2": 0.05 * jax.random.normal(ks[10], (c2,), jnp.float32),
        "v2": jax.random.uniform(ks[11], (c2,), jnp.float32, 0.5, 1.5),
    }


if __name__ == "__main__":
    key = jax.random.PRNGKey(0)
    kx, kp = jax.random.split(key)

    N, C_IN, H, W = 2, 4, 16, 16          # Down(in_channels=4, out_channels=8)
    C_OUT = 8
    x = jax.random.normal(kx, (N, C_IN, H, W), jnp.float32)
    params = make_params(kp, C_IN, C_OUT, C_OUT)

    # hoisted (one-time) weight/BN/mask prep -- not in the per-call path
    prep = prepare_down_params(params, H, W)

    out = down_forward(x, prep, c_out=C_OUT)
    out = jax.block_until_ready(out)

    ref = jax.block_until_ready(ref_down(x, params))
    assert out.shape == (N, C_OUT, H // 2, W // 2), out.shape
    # bf16 MXU operands for both convs -> bf16-level tolerance vs the f32 HIGHEST ref
    assert jnp.allclose(out, ref, atol=3e-2, rtol=3e-2), \
        float(jnp.max(jnp.abs(out - ref)))

    print("KERNEL_OK")
</pallas_src>

<mosaic_0001>
module attributes {stable_mosaic.version = 11 : i64} {
  func.func @down_kernel(%arg0: i32, %arg1: memref<64x128xbf16, #tpu.memory_space<vmem>>, %arg2: memref<128x128xbf16, #tpu.memory_space<vmem>>, %arg3: memref<1x128xf32, #tpu.memory_space<vmem>>, %arg4: memref<1x128xf32, #tpu.memory_space<vmem>>, %arg5: memref<64x128xf32, #tpu.memory_space<vmem>>, %arg6: memref<128x128xbf16, #tpu.memory_space<vmem>>, %arg7: memref<1x128xf32, #tpu.memory_space<vmem>>, %arg8: memref<1x128xf32, #tpu.memory_space<vmem>>, %arg9: memref<64x128xf32, #tpu.memory_space<vmem>>) attributes {dimension_semantics = [#tpu.dimension_semantics<parallel>], iteration_bounds = array<i64: 2>, scalar_prefetch = 0 : i64, scratch_operands = 0 : i64, tpu.core_type = #tpu.core_type<tc>, window_params = [{transform_indices = @transform_0, window_bounds = array<i64: 64, 128>}, {pipeline_mode = #tpu.pipeline_mode<synchronous>, transform_indices = @transform_1, window_bounds = array<i64: 128, 128>}, {pipeline_mode = #tpu.pipeline_mode<synchronous>, transform_indices = @transform_2, window_bounds = array<i64: 1, 128>}, {pipeline_mode = #tpu.pipeline_mode<synchronous>, transform_indices = @transform_3, window_bounds = array<i64: 1, 128>}, {pipeline_mode = #tpu.pipeline_mode<synchronous>, transform_indices = @transform_4, window_bounds = array<i64: 64, 128>}, {pipeline_mode = #tpu.pipeline_mode<synchronous>, transform_indices = @transform_5, window_bounds = array<i64: 128, 128>}, {pipeline_mode = #tpu.pipeline_mode<synchronous>, transform_indices = @transform_6, window_bounds = array<i64: 1, 128>}, {pipeline_mode = #tpu.pipeline_mode<synchronous>, transform_indices = @transform_7, window_bounds = array<i64: 1, 128>}, {transform_indices = @transform_8, window_bounds = array<i64: 64, 128>}]} {
    %c0 = arith.constant 0 : index
    %c0_0 = arith.constant 0 : index
    %0 = vector.load %arg1[%c0, %c0_0] : memref<64x128xbf16, #tpu.memory_space<vmem>>, vector<64x128xbf16>
    %c0_1 = arith.constant 0 : index
    %c0_2 = arith.constant 0 : index
    %1 = vector.load %arg2[%c0_1, %c0_2] : memref<128x128xbf16, #tpu.memory_space<vmem>>, vector<128x128xbf16>
    %cst = arith.constant dense<0.000000e+00> : vector<64x128xf32>
    %2 = tpu.matmul %0, %1, %cst {dimension_numbers = #tpu.dot_dimension_numbers<[1], [0], [0], [1], [0, 0, 1, 1], [], []>} : vector<64x128xbf16>, vector<128x128xbf16>, vector<64x128xf32> -> vector<64x128xf32>
    %c0_3 = arith.constant 0 : index
    %c0_4 = arith.constant 0 : index
    %3 = vector.load %arg3[%c0_3, %c0_4] : memref<1x128xf32, #tpu.memory_space<vmem>>, vector<1x128xf32>
    %4 = vector.broadcast %3 : vector<1x128xf32> to vector<64x128xf32>
    %5 = arith.mulf %2, %4 : vector<64x128xf32>
    %c0_5 = arith.constant 0 : index
    %c0_6 = arith.constant 0 : index
    %6 = vector.load %arg4[%c0_5, %c0_6] : memref<1x128xf32, #tpu.memory_space<vmem>>, vector<1x128xf32>
    %7 = vector.broadcast %6 : vector<1x128xf32> to vector<64x128xf32>
    %8 = arith.addf %5, %7 : vector<64x128xf32>
    %cst_7 = arith.constant 0.000000e+00 : f32
    %9 = vector.broadcast %cst_7 : f32 to vector<64x128xf32>
    %10 = arith.maximumf %8, %9 : vector<64x128xf32>
    %11 = vector.shape_cast %10 : vector<64x128xf32> to vector<1x64x128xf32>
    %c0_8 = arith.constant 0 : index
    %c0_9 = arith.constant 0 : index
    %12 = vector.load %arg5[%c0_8, %c0_9] : memref<64x128xf32, #tpu.memory_space<vmem>>, vector<64x128xf32>
    %13 = vector.shape_cast %12 : vector<64x128xf32> to vector<1x64x128xf32>
    %14 = arith.mulf %11, %13 : vector<1x64x128xf32>
    %15 = vector.shape_cast %14 : vector<1x64x128xf32> to vector<64x128xf32>
    %16 = arith.truncf %15 : vector<64x128xf32> to vector<64x128xbf16>
    %c0_10 = arith.constant 0 : index
    %c0_11 = arith.constant 0 : index
    %17 = vector.load %arg6[%c0_10, %c0_11] : memref<128x128xbf16, #tpu.memory_space<vmem>>, vector<128x128xbf16>
    %cst_12 = arith.constant dense<0.000000e+00> : vector<64x128xf32>
    %18 = tpu.matmul %16, %17, %cst_12 {dimension_numbers = #tpu.dot_dimension_numbers<[1], [0], [0], [1], [0, 0, 1, 1], [], []>} : vector<64x128xbf16>, vector<128x128xbf16>, vector<64x128xf32> -> vector<64x128xf32>
    %c0_13 = arith.constant 0 : index
    %c0_14 = arith.constant 0 : index
    %19 = vector.load %arg7[%c0_13, %c0_14] : memref<1x128xf32, #tpu.memory_space<vmem>>, vector<1x128xf32>
    %20 = vector.broadcast %19 : vector<1x128xf32> to vector<64x128xf32>
    %21 = arith.mulf %18, %20 : vector<64x128xf32>
    %c0_15 = arith.constant 0 : index
    %c0_16 = arith.constant 0 : index
    %22 = vector.load %arg8[%c0_15, %c0_16] : memref<1x128xf32, #tpu.memory_space<vmem>>, vector<1x128xf32>
    %23 = vector.broadcast %22 : vector<1x128xf32> to vector<64x128xf32>
    %24 = arith.addf %21, %23 : vector<64x128xf32>
    %cst_17 = arith.constant 0.000000e+00 : f32
    %25 = vector.broadcast %cst_17 : f32 to vector<64x128xf32>
    %26 = arith.maximumf %24, %25 : vector<64x128xf32>
    %c0_18 = arith.constant 0 : index
    %c0_19 = arith.constant 0 : index
    %27 = vector.load %arg9[%c0_18, %c0_19] : memref<64x128xf32, #tpu.memory_space<vmem>>, vector<64x128xf32>
    tpu.vector_store %arg9[%c0_18, %c0_19], %26 {strides = array<i32>} : memref<64x128xf32, #tpu.memory_space<vmem>>, vector<64x128xf32>,
    return
  }
  func.func @transform_0(%arg0: i32) -> (i32, i32) {
    %c0_i32 = arith.constant 0 : i32
    %c0_i32_0 = arith.constant 0 : i32
    return %arg0, %c0_i32 : i32, i32
  }
  func.func @transform_1(%arg0: i32) -> (i32, i32) {
    %c0_i32 = arith.constant 0 : i32
    %c0_i32_0 = arith.constant 0 : i32
    %c0_i32_1 = arith.constant 0 : i32
    return %c0_i32, %c0_i32_0 : i32, i32
  }
  func.func @transform_2(%arg0: i32) -> (i32, i32) {
    %c0_i32 = arith.constant 0 : i32
    %c0_i32_0 = arith.constant 0 : i32
    %c0_i32_1 = arith.constant 0 : i32
    return %c0_i32, %c0_i32_0 : i32, i32
  }
  func.func @transform_3(%arg0: i32) -> (i32, i32) {
    %c0_i32 = arith.constant 0 : i32
    %c0_i32_0 = arith.constant 0 : i32
    %c0_i32_1 = arith.constant 0 : i32
    return %c0_i32, %c0_i32_0 : i32, i32
  }
  func.func @transform_4(%arg0: i32) -> (i32, i32) {
    %c0_i32 = arith.constant 0 : i32
    %c0_i32_0 = arith.constant 0 : i32
    %c0_i32_1 = arith.constant 0 : i32
    return %c0_i32, %c0_i32_0 : i32, i32
  }
  func.func @transform_5(%arg0: i32) -> (i32, i32) {
    %c0_i32 = arith.constant 0 : i32
    %c0_i32_0 = arith.constant 0 : i32
    %c0_i32_1 = arith.constant 0 : i32
    return %c0_i32, %c0_i32_0 : i32, i32
  }
  func.func @transform_6(%arg0: i32) -> (i32, i32) {
    %c0_i32 = arith.constant 0 : i32
    %c0_i32_0 = arith.constant 0 : i32
    %c0_i32_1 = arith.constant 0 : i32
    return %c0_i32, %c0_i32_0 : i32, i32
  }
  func.func @transform_7(%arg0: i32) -> (i32, i32) {
    %c0_i32 = arith.constant 0 : i32
    %c0_i32_0 = arith.constant 0 : i32
    %c0_i32_1 = arith.constant 0 : i32
    return %c0_i32, %c0_i32_0 : i32, i32
  }
  func.func @transform_8(%arg0: i32) -> (i32, i32) {
    %c0_i32 = arith.constant 0 : i32
    %c0_i32_0 = arith.constant 0 : i32
    return %arg0, %c0_i32 : i32, i32
  }
}

</mosaic_0001>

<llo_original>
// kernel: down_forward.1
$region0: #{down_forward.1}
  #allocation0 [shape = 'u32[]', space=smem, size = 0x4, offset = 0x4, fixed_abs, tag = 'smem constant byte address 0x4 - core index']
  #allocation1 [shape = 'u32[144,128]{1,0:T(1,128)}', space=vmem, size = 0x12000, scoped, tag = 'internal scratch']
  %s0 = inlined_call_operand.vmem [shape: bf16[128,128], index: 0, kind: input, shape index: {}]
  %s1 = inlined_call_operand.vmem [shape: bf16[128,128], index: 1, kind: input, shape index: {}]
  %s2 = inlined_call_operand.vmem [shape: f32[1,128], index: 2, kind: input, shape index: {}]
  %s3 = inlined_call_operand.vmem [shape: f32[1,128], index: 3, kind: input, shape index: {}]
  %s4 = inlined_call_operand.vmem [shape: f32[64,128], index: 4, kind: input, shape index: {}]
  %s5 = inlined_call_operand.vmem [shape: bf16[128,128], index: 5, kind: input, shape index: {}]
  %s6 = inlined_call_operand.vmem [shape: f32[1,128], index: 6, kind: input, shape index: {}]
  %s7 = inlined_call_operand.vmem [shape: f32[1,128], index: 7, kind: input, shape index: {}]
  %s8 = inlined_call_operand.vmem [shape: f32[128,128], index: 8, kind: output, shape index: {}]
  %s9 = sld [smem:[#allocation0]]
  $region65: #{down_forward.1} parent=0
    _
  %s11 = ssub.s32 1, %s9
  %s12 = scalar_select 0, %s11, %s9
  loop: start=0, step=1, limit=4
  $region2: #{down_forward.1} parent=0 // loop_pre_header
    _
  $region3: #{down_forward.1} parent=0 // loop_header
    %s14 = sphi 0, %s18
    %p15 = scmp.ge.s32.totalorder %s14, 4
    %s24 = sphi 0, %s26
    %s27 = sphi 0, %s24
    %s28 = sphi 0, %s27
    %s44 = sphi 0, %s28
    %s48 = sphi 0, %s48
    %s50 = sphi 0, %s48
    %s51 = sphi 0, %s50
    %s65 = sphi 0, %s51
    %s69 = sphi 0, %s69
    %s71 = sphi 0, %s69
    %s72 = sphi 0, %s71
    %s86 = sphi 0, %s72
    %s90 = sphi 0, %s90
    %s92 = sphi 0, %s90
    %s93 = sphi 0, %s92
    %s107 = sphi 0, %s93
    %s111 = sphi 0, %s111
    %s113 = sphi 0, %s111
    %s114 = sphi 0, %s113
    %s128 = sphi 0, %s114
    %s132 = sphi 0, %s132
    %s134 = sphi 0, %s132
    %s135 = sphi 0, %s134
    %s149 = sphi 0, %s135
    %s153 = sphi 0, %s153
    %s155 = sphi 0, %s153
    %s156 = sphi 0, %s155
    %s170 = sphi 0, %s156
    %s174 = sphi 0, %s174
    %s176 = sphi 0, %s174
    %s177 = sphi 0, %s176
    %s191 = sphi 0, %s177
    %s197 = sphi 0, %s199
    %s200 = sphi 0, %s197
    %s201 = sphi 0, %s200
    %s217 = sphi 0, %s201
  $region4: #{down_forward.1} parent=0 // loop_header_branch
    %17 = sbr.rel (%p15) target = $region8
  $region5: #{down_forward.1} parent=0 // loop_body
    %s19 = ssub.s32 %s14, 1
    %s20 = ssub.s32 %s14, 2
    %s21 = sadd.s32 %s14, 1
    %s22 = ssub.s32 %s14, %s21
    %p23 = scmp.eq.s32.totalorder %s22, 0
    %s25 = sadd.s32 %s24, 1
    %s26 = scalar_select %p23, %s24, %s25
    %p29 = pneg %p23
    %p30 = scmp.eq.s32.totalorder %s14, 1
    %p31 = por %p29, %p30
    %p32 = scmp.ne.s32.totalorder %s24, %s27
    %p33 = scmp.eq.s32.totalorder %s14, 0
    %p34 = por %p32, %p33
    %p35 = scmp.ne.s32.totalorder %s24, %s27
    %p36 = scmp.eq.s32.totalorder %s19, 1
    %p37 = por %p35, %p36
    %p38 = scmp.ne.s32.totalorder %s27, %s28
    %p39 = scmp.eq.s32.totalorder %s19, 0
    %p40 = por %p38, %p39
    %p41 = scmp.ne.s32.totalorder %s27, %s28
    %p42 = scmp.eq.s32.totalorder %s20, 1
    %p43 = por %p41, %p42
    %p45 = scmp.ne.s32.totalorder %s28, %s44
    %p46 = scmp.eq.s32.totalorder %s20, 0
    %p47 = por %p45, %p46
    %s49 = sadd.s32 %s48, 1
    %p52 = scmp.eq.s32.totalorder %s14, 1
    %p53 = scmp.ne.s32.totalorder %s48, %s50
    %p54 = scmp.eq.s32.totalorder %s14, 0
    %p55 = por %p53, %p54
    %p56 = scmp.ne.s32.totalorder %s48, %s50
    %p57 = scmp.eq.s32.totalorder %s19, 1
    %p58 = por %p56, %p57
    %p59 = scmp.ne.s32.totalorder %s50, %s51
    %p60 = scmp.eq.s32.totalorder %s19, 0
    %p61 = por %p59, %p60
    %p62 = scmp.ne.s32.totalorder %s50, %s51
    %p63 = scmp.eq.s32.totalorder %s20, 1
    %p64 = por %p62, %p63
    %p66 = scmp.ne.s32.totalorder %s51, %s65
    %p67 = scmp.eq.s32.totalorder %s20, 0
    %p68 = por %p66, %p67
    %s70 = sadd.s32 %s69, 1
    %p73 = scmp.eq.s32.totalorder %s14, 1
    %p74 = scmp.ne.s32.totalorder %s69, %s71
    %p75 = scmp.eq.s32.totalorder %s14, 0
    %p76 = por %p74, %p75
    %p77 = scmp.ne.s32.totalorder %s69, %s71
    %p78 = scmp.eq.s32.totalorder %s19, 1
    %p79 = por %p77, %p78
    %p80 = scmp.ne.s32.totalorder %s71, %s72
    %p81 = scmp.eq.s32.totalorder %s19, 0
    %p82 = por %p80, %p81
    %p83 = scmp.ne.s32.totalorder %s71, %s72
    %p84 = scmp.eq.s32.totalorder %s20, 1
    %p85 = por %p83, %p84
    %p87 = scmp.ne.s32.totalorder %s72, %s86
    %p88 = scmp.eq.s32.totalorder %s20, 0
    %p89 = por %p87, %p88
    %s91 = sadd.s32 %s90, 1
    %p94 = scmp.eq.s32.totalorder %s14, 1
    %p95 = scmp.ne.s32.totalorder %s90, %s92
    %p96 = scmp.eq.s32.totalorder %s14, 0
    %p97 = por %p95, %p96
    %p98 = scmp.ne.s32.totalorder %s90, %s92
    %p99 = scmp.eq.s32.totalorder %s19, 1
    %p100 = por %p98, %p99
    %p101 = scmp.ne.s32.totalorder %s92, %s93
    %p102 = scmp.eq.s32.totalorder %s19, 0
    %p103 = por %p101, %p102
    %p104 = scmp.ne.s32.totalorder %s92, %s93
    %p105 = scmp.eq.s32.totalorder %s20, 1
    %p106 = por %p104, %p105
    %p108 = scmp.ne.s32.totalorder %s93, %s107
    %p109 = scmp.eq.s32.totalorder %s20, 0
    %p110 = por %p108, %p109
    %s112 = sadd.s32 %s111, 1
    %p115 = scmp.eq.s32.totalorder %s14, 1
    %p116 = scmp.ne.s32.totalorder %s111, %s113
    %p117 = scmp.eq.s32.totalorder %s14, 0
    %p118 = por %p116, %p117
    %p119 = scmp.ne.s32.totalorder %s111, %s113
    %p120 = scmp.eq.s32.totalorder %s19, 1
    %p121 = por %p119, %p120
    %p122 = scmp.ne.s32.totalorder %s113, %s114
    %p123 = scmp.eq.s32.totalorder %s19, 0
    %p124 = por %p122, %p123
    %p125 = scmp.ne.s32.totalorder %s113, %s114
    %p126 = scmp.eq.s32.totalorder %s20, 1
    %p127 = por %p125, %p126
    %p129 = scmp.ne.s32.totalorder %s114, %s128
    %p130 = scmp.eq.s32.totalorder %s20, 0
    %p131 = por %p129, %p130
    %s133 = sadd.s32 %s132, 1
    %p136 = scmp.eq.s32.totalorder %s14, 1
    %p137 = scmp.ne.s32.totalorder %s132, %s134
    %p138 = scmp.eq.s32.totalorder %s14, 0
    %p139 = por %p137, %p138
    %p140 = scmp.ne.s32.totalorder %s132, %s134
    %p141 = scmp.eq.s32.totalorder %s19, 1
    %p142 = por %p140, %p141
    %p143 = scmp.ne.s32.totalorder %s134, %s135
    %p144 = scmp.eq.s32.totalorder %s19, 0
    %p145 = por %p143, %p144
    %p146 = scmp.ne.s32.totalorder %s134, %s135
    %p147 = scmp.eq.s32.totalorder %s20, 1
    %p148 = por %p146, %p147
    %p150 = scmp.ne.s32.totalorder %s135, %s149
    %p151 = scmp.eq.s32.totalorder %s20, 0
    %p152 = por %p150, %p151
    %s154 = sadd.s32 %s153, 1
    %p157 = scmp.eq.s32.totalorder %s14, 1
    %p158 = scmp.ne.s32.totalorder %s153, %s155
    %p159 = scmp.eq.s32.totalorder %s14, 0
    %p160 = por %p158, %p159
    %p161 = scmp.ne.s32.totalorder %s153, %s155
    %p162 = scmp.eq.s32.totalorder %s19, 1
    %p163 = por %p161, %p162
    %p164 = scmp.ne.s32.totalorder %s155, %s156
    %p165 = scmp.eq.s32.totalorder %s19, 0
    %p166 = por %p164, %p165
    %p167 = scmp.ne.s32.totalorder %s155, %s156
    %p168 = scmp.eq.s32.totalorder %s20, 1
    %p169 = por %p167, %p168
    %p171 = scmp.ne.s32.totalorder %s156, %s170
    %p172 = scmp.eq.s32.totalorder %s20, 0
    %p173 = por %p171, %p172
    %s175 = sadd.s32 %s174, 1
    %p178 = scmp.eq.s32.totalorder %s14, 1
    %p179 = scmp.ne.s32.totalorder %s174, %s176
    %p180 = scmp.eq.s32.totalorder %s14, 0
    %p181 = por %p179, %p180
    %p182 = scmp.ne.s32.totalorder %s174, %s176
    %p183 = scmp.eq.s32.totalorder %s19, 1
    %p184 = por %p182, %p183
    %p185 = scmp.ne.s32.totalorder %s176, %s177
    %p186 = scmp.eq.s32.totalorder %s19, 0
    %p187 = por %p185, %p186
    %p188 = scmp.ne.s32.totalorder %s176, %s177
    %p189 = scmp.eq.s32.totalorder %s20, 1
    %p190 = por %p188, %p189
    %p192 = scmp.ne.s32.totalorder %s177, %s191
    %p193 = scmp.eq.s32.totalorder %s20, 0
    %p194 = por %p192, %p193
    %s195 = ssub.s32 %s14, %s21
    %p196 = scmp.eq.s32.totalorder %s195, 0
    %s198 = sadd.s32 %s197, 1
    %s199 = scalar_select %p196, %s197, %s198
    %p202 = pneg %p196
    %p203 = scmp.eq.s32.totalorder %s14, 1
    %p204 = por %p202, %p203
    %p205 = scmp.ne.s32.totalorder %s197, %s200
    %p206 = scmp.eq.s32.totalorder %s14, 0
    %p207 = por %p205, %p206
    %p208 = scmp.ne.s32.totalorder %s197, %s200
    %p209 = scmp.eq.s32.totalorder %s19, 1
    %p210 = por %p208, %p209
    %p211 = scmp.ne.s32.totalorder %s200, %s201
    %p212 = scmp.eq.s32.totalorder %s19, 0
    %p213 = por %p211, %p212
    %p214 = scmp.ne.s32.totalorder %s200, %s201
    %p215 = scmp.eq.s32.totalorder %s20, 1
    %p216 = por %p214, %p215
    %p218 = scmp.ne.s32.totalorder %s201, %s217
    %p219 = scmp.eq.s32.totalorder %s20, 0
    %p220 = por %p218, %p219
    %p221 = scmp.le.s32.totalorder 1, %s14
    %p222 = scmp.lt.s32.totalorder %s14, 3
    %p223 = pnand %p221, %p222
    %p224 = pneg %p223
    // Predicated region
    $region9: #{down_forward.1} parent=5 // pred_check
      _
    $region10: #{down_forward.1} parent=5 // pred_check_branch
      %226 = sbr.rel (%p223) target = $region12
    $region11: #{down_forward.1} parent=5 // pred_region
      %s227 = ssub.s32 %s14, 1
      // Predicated region
      $region13: #{down_forward.1} parent=11 // pred_check
        %p228 = pneg %p61
      $region14: #{down_forward.1} parent=11 // pred_check_branch
        %230 = sbr.rel (%p228) target = $region16
      $region15: #{down_forward.1} parent=11 // pred_region
        _
      $region16: #{down_forward.1} parent=11 // pred_fallthru
        _
      // Predicated region
      $region17: #{down_forward.1} parent=11 // pred_check
        %p231 = pneg %p82
      $region18: #{down_forward.1} parent=11 // pred_check_branch
        %233 = sbr.rel (%p231) target = $region20
      $region19: #{down_forward.1} parent=11 // pred_region
        _
      $region20: #{down_forward.1} parent=11 // pred_fallthru
        _
      // Predicated region
      $region21: #{down_forward.1} parent=11 // pred_check
        %p234 = pneg %p103
      $region22: #{down_forward.1} parent=11 // pred_check_branch
        %236 = sbr.rel (%p234) target = $region24
      $region23: #{down_forward.1} parent=11 // pred_region
        _
      $region24: #{down_forward.1} parent=11 // pred_fallthru
        _
      // Predicated region
      $region25: #{down_forward.1} parent=11 // pred_check
        %p237 = pneg %p124
      $region26: #{down_forward.1} parent=11 // pred_check_branch
        %239 = sbr.rel (%p237) target = $region28
      $region27: #{down_forward.1} parent=11 // pred_region
        _
      $region28: #{down_forward.1} parent=11 // pred_fallthru
        _
      // Predicated region
      $region29: #{down_forward.1} parent=11 // pred_check
        %p240 = pneg %p145
      $region30: #{down_forward.1} parent=11 // pred_check_branch
        %242 = sbr.rel (%p240) target = $region32
      $region31: #{down_forward.1} parent=11 // pred_region
        _
      $region32: #{down_forward.1} parent=11 // pred_fallthru
        _
      // Predicated region
      $region33: #{down_forward.1} parent=11 // pred_check
        %p243 = pneg %p166
      $region34: #{down_forward.1} parent=11 // pred_check_branch
        %245 = sbr.rel (%p243) target = $region36
      $region35: #{down_forward.1} parent=11 // pred_region
        _
      $region36: #{down_forward.1} parent=11 // pred_fallthru
        _
      // Predicated region
      $region37: #{down_forward.1} parent=11 // pred_check
        %p246 = pneg %p187
      $region38: #{down_forward.1} parent=11 // pred_check_branch
        %248 = sbr.rel (%p246) target = $region40
      $region39: #{down_forward.1} parent=11 // pred_region
        _
      $region40: #{down_forward.1} parent=11 // pred_fallthru
        _
    $region12: #{down_forward.1} parent=5 // pred_fallthru
      _
    %p249 = scmp.lt.s32.totalorder %s14, 2
    // Predicated region
    $region41: #{down_forward.1} parent=5 // pred_check
      %p250 = pneg %p249
    $region42: #{down_forward.1} parent=5 // pred_check_branch
      %252 = sbr.rel (%p250) target = $region44
    $region43: #{down_forward.1} parent=5 // pred_region
      // Predicated region
      $region45: #{down_forward.1} parent=43 // pred_check
        %p253 = pneg %p34
      $region46: #{down_forward.1} parent=43 // pred_check_branch
        %255 = sbr.rel (%p253) target = $region48
      $region47: #{down_forward.1} parent=43 // pred_region
        %s256 = smul.u32 8, %s14
        %p257 = scmp.lt.s32.totalorder %s256, 15
        %s258 = scalar_select %p257, %s256, 15
        %s259 = smul.addr %s258, 4
        %s260 = scalar_lea.vmem %s0, %s259
        %s261 = smul.u32 8, %s14
      $region48: #{down_forward.1} parent=43 // pred_fallthru
        _
    $region44: #{down_forward.1} parent=5 // pred_fallthru
      _
    %p262 = scmp.le.s32.totalorder 1, %s14
    %p263 = scmp.lt.s32.totalorder %s14, 3
    %p264 = pnand %p262, %p263
    %p265 = pneg %p264
    // Predicated region
    $region49: #{down_forward.1} parent=5 // pred_check
      _
    $region50: #{down_forward.1} parent=5 // pred_check_branch
      %267 = sbr.rel (%p264) target = $region52
    $region51: #{down_forward.1} parent=5 // pred_region
      %s268 = ssub.s32 %s14, 1
      %s269 = smul.u32 8, %s19
      %p270 = scmp.lt.s32.totalorder %s269, 15
      %s271 = scalar_select %p270, %s269, 15
      %s272 = smul.addr %s271, 4
      %s273 = scalar_lea.vmem %s0, %s272
      %p274 = pneg %p40
      %p275 = pneg %p37
      %p276 = pneg %p61
      %p277 = pneg %p58
      %p278 = pneg %p82
      %p279 = pneg %p79
      %p280 = pneg %p103
      %p281 = pneg %p100
      %p282 = pneg %p124
      %p283 = pneg %p121
      %p284 = pneg %p145
      %p285 = pneg %p142
      %p286 = pneg %p166
      %p287 = pneg %p163
      %p288 = pneg %p187
      %p289 = pneg %p184
      %p290 = pneg %p213
      %p291 = pneg %p210
      %s292 = smul.u32 8, %s19
      %p293 = scmp.lt.s32.totalorder %s292, 15
      %s294 = scalar_select %p293, %s292, 15
      %s295 = smul.addr %s294, 8
      %s296 = scalar_lea.vmem %s8, %s295
      %s297 = smul.u32 8, %s19
      %p298 = scmp.lt.s32.totalorder %s297, 15
      %s299 = scalar_select %p298, %s297, 15
      %s300 = smul.addr %s299, 4
      %s301 = scalar_lea.vmem %s0, %s300
      %s302 = smul.u32 8, %s19
      %s303 = smul.u32 8, %s19
      %p304 = scmp.lt.s32.totalorder %s303, 15
      %s305 = scalar_select %p304, %s303, 15
      %s306 = smul.addr %s305, 8
      %s307 = scalar_lea.vmem %s8, %s306
      %s308 = smul.u32 8, %s19
      %v310 = vld [vmem:[%s301] sm:$0xf]
      %v311 = vld [vmem:[%s301 + $0x4] sm:$0xf]
      %v312 = vld [vmem:[%s301 + $0x8] sm:$0xf]
      %v313 = vld [vmem:[%s301 + $0xc] sm:$0xf]
      %v314 = vld [vmem:[%s301 + $0x10] sm:$0xf]
      %v315 = vld [vmem:[%s301 + $0x14] sm:$0xf]
      %v316 = vld [vmem:[%s301 + $0x18] sm:$0xf]
      %v317 = vld [vmem:[%s301 + $0x1c] sm:$0xf]
      %v318 = vld [vmem:[%s1] sm:$0xf]
      %v319 = vld [vmem:[%s1 + $0x4] sm:$0xf]
      %v320 = vld [vmem:[%s1 + $0x8] sm:$0xf]
      %v321 = vld [vmem:[%s1 + $0xc] sm:$0xf]
      %v322 = vld [vmem:[%s1 + $0x10] sm:$0xf]
      %v323 = vld [vmem:[%s1 + $0x14] sm:$0xf]
      %v324 = vld [vmem:[%s1 + $0x18] sm:$0xf]
      %v325 = vld [vmem:[%s1 + $0x1c] sm:$0xf]
      %v326 = vld [vmem:[%s1 + $0x20] sm:$0xf]
      %v327 = vld [vmem:[%s1 + $0x24] sm:$0xf]
      %v328 = vld [vmem:[%s1 + $0x28] sm:$0xf]
      %v329 = vld [vmem:[%s1 + $0x2c] sm:$0xf]
      %v330 = vld [vmem:[%s1 + $0x30] sm:$0xf]
      %v331 = vld [vmem:[%s1 + $0x34] sm:$0xf]
      %v332 = vld [vmem:[%s1 + $0x38] sm:$0xf]
      %v333 = vld [vmem:[%s1 + $0x3c] sm:$0xf]
      %v342 = vunpack.c.l.b16 %v310
      %v343 = vunpack.c.l.b16 %v311
      %v344 = vunpack.c.l.b16 %v312
      %v345 = vunpack.c.l.b16 %v313
      %v346 = vunpack.c.l.b16 %v314
      %v347 = vunpack.c.l.b16 %v315
      %v348 = vunpack.c.l.b16 %v316
      %v349 = vunpack.c.l.b16 %v317
      %v350 = vpack.c.b16 %v343, %v342
      %v351 = vpack.c.b16 %v345, %v344
      %v352 = vpack.c.b16 %v347, %v346
      %v353 = vpack.c.b16 %v349, %v348
      %v374 = vunpack.c.l.b16 %v318
      %v375 = vunpack.c.l.b16 %v319
      %v376 = vunpack.c.l.b16 %v320
      %v377 = vunpack.c.l.b16 %v321
      %v378 = vunpack.c.l.b16 %v322
      %v379 = vunpack.c.l.b16 %v323
      %v380 = vunpack.c.l.b16 %v324
      %v381 = vunpack.c.l.b16 %v325
      %v382 = vunpack.c.l.b16 %v326
      %v383 = vunpack.c.l.b16 %v327
      %v384 = vunpack.c.l.b16 %v328
      %v385 = vunpack.c.l.b16 %v329
      %v386 = vunpack.c.l.b16 %v330
      %v387 = vunpack.c.l.b16 %v331
      %v388 = vunpack.c.l.b16 %v332
      %v389 = vunpack.c.l.b16 %v333
      %v390 = vpack.c.b16 %v375, %v374
      %v391 = vpack.c.b16 %v377, %v376
      %v392 = vpack.c.b16 %v379, %v378
      %v393 = vpack.c.b16 %v381, %v380
      %v394 = vpack.c.b16 %v383, %v382
      %v395 = vpack.c.b16 %v385, %v384
      %v396 = vpack.c.b16 %v387, %v386
      %v397 = vpack.c.b16 %v389, %v388
      %406 = vmatprep.subr.bf16.mxu0 0
      %407 = vmatpush1.bf16.msra.mxu0 %v390
      %408 = vmatprep.subr.bf16.mxu0 0
      %409 = vmatpush1.bf16.msra.mxu0 %v391
      %410 = vmatprep.subr.bf16.mxu0 0
      %411 = vmatpush1.bf16.msra.mxu0 %v392
      %412 = vmatprep.subr.bf16.mxu0 0
      %413 = vmatpush1.bf16.msra.mxu0 %v393
      %414 = vmatprep.subr.bf16.mxu0 0
      %415 = vmatpush1.bf16.msra.mxu0 %v394
      %416 = vmatprep.subr.bf16.mxu0 0
      %417 = vmatpush1.bf16.msra.mxu0 %v395
      %418 = vmatprep.subr.bf16.mxu0 0
      %419 = vmatpush1.bf16.msra.mxu0 %v396
      %420 = vmatprep.subr.bf16.mxu0 0
      %421 = vmatpush1.bf16.msra.mxu0 %v397
      %422 = vmatprep.subr.bf16.mxu0 0
      %423 = vmatpush1.bf16.msra.mxu0 0
      %424 = vmatprep.subr.bf16.mxu0 0
      %425 = vmatpush1.bf16.msra.mxu0 0
      %426 = vmatprep.subr.bf16.mxu0 0
      %427 = vmatpush1.bf16.msra.mxu0 0
      %428 = vmatprep.subr.bf16.mxu0 0
      %429 = vmatpush1.bf16.msra.mxu0 0
      %430 = vmatprep.subr.bf16.mxu0 0
      %431 = vmatpush1.bf16.msra.mxu0 0
      %432 = vmatprep.subr.bf16.mxu0 0
      %433 = vmatpush1.bf16.msra.mxu0 0
      %434 = vmatprep.subr.bf16.mxu0 0
      %435 = vmatpush1.bf16.msra.mxu0 0
      %436 = vmatprep.subr.bf16.mxu0 0
      %437 = vmatpush1.bf16.msra.mxu0 0
      %438 = vmatprep.mubr.bf16.mxu0 0
      %439 = vmatmul.mubr.bf16.gmra.mrb[0].mxu0 %v350
      %v440 = vpop.f32.mrb[0].mxu0
      %v441 = vadd.f32 0.0, %v440
      %v442 = vpop.f32.mrb[0].mxu0
      %v443 = vpop.f32.mrb[0].mxu0
      %v444 = vadd.f32 0.0, %v443
      %v445 = vpop.f32.mrb[0].mxu0
      %446 = vmatprep.mubr.bf16.mxu0 0
      %447 = vmatmul.mubr.bf16.gmra.mrb[0].mxu0 %v351
      %v448 = vpop.f32.mrb[0].mxu0
      %v449 = vadd.f32 0.0, %v448
      %v450 = vpop.f32.mrb[0].mxu0
      %v451 = vpop.f32.mrb[0].mxu0
      %v452 = vadd.f32 0.0, %v451
      %v453 = vpop.f32.mrb[0].mxu0
      %454 = vmatprep.mubr.bf16.mxu0 0
      %455 = vmatmul.mubr.bf16.gmra.mrb[0].mxu0 %v352
      %v456 = vpop.f32.mrb[0].mxu0
      %v457 = vadd.f32 0.0, %v456
      %v458 = vpop.f32.mrb[0].mxu0
      %v459 = vpop.f32.mrb[0].mxu0
      %v460 = vadd.f32 0.0, %v459
      %v461 = vpop.f32.mrb[0].mxu0
      %462 = vmatprep.mubr.bf16.mxu0 0
      %463 = vmatmul.mubr.bf16.gmra.mrb[0].mxu0 %v353
      %v464 = vpop.f32.mrb[0].mxu0
      %v465 = vadd.f32 0.0, %v464
      %v466 = vpop.f32.mrb[0].mxu0
      %v467 = vpop.f32.mrb[0].mxu0
      %v468 = vadd.f32 0.0, %v467
      %v469 = vpop.f32.mrb[0].mxu0
      %470 = vdwg.mxu0
      %v471 = vld [vmem:[%s2] sm:$0x1]
      %v473 = vlaneseq
      %v474 = vshrl.u32 %v473, 7
      %v475 = vsub.s32 0, %v474
      %v476 = vrot.slane %v471, %v475
      %v478 = vmul.f32 %v441, %v476
      %v479 = vmul.f32 %v444, %v476
      %v480 = vmul.f32 %v449, %v476
      %v481 = vmul.f32 %v452, %v476
      %v482 = vmul.f32 %v457, %v476
      %v483 = vmul.f32 %v460, %v476
      %v484 = vmul.f32 %v465, %v476
      %v485 = vmul.f32 %v468, %v476
      %v486 = vld [vmem:[%s3] sm:$0x1]
      %v488 = vlaneseq
      %v489 = vshrl.u32 %v488, 7
      %v490 = vsub.s32 0, %v489
      %v491 = vrot.slane %v486, %v490
      %v493 = vadd.f32 %v478, %v491
      %v494 = vadd.f32 %v479, %v491
      %v495 = vadd.f32 %v480, %v491
      %v496 = vadd.f32 %v481, %v491
      %v497 = vadd.f32 %v482, %v491
      %v498 = vadd.f32 %v483, %v491
      %v499 = vadd.f32 %v484, %v491
      %v500 = vadd.f32 %v485, %v491
      %v501 = vmax.f32 %v493, 0.0
      %v502 = vmax.f32 %v494, 0.0
      %v503 = vmax.f32 %v495, 0.0
      %v504 = vmax.f32 %v496, 0.0
      %v505 = vmax.f32 %v497, 0.0
      %v506 = vmax.f32 %v498, 0.0
      %v507 = vmax.f32 %v499, 0.0
      %v508 = vmax.f32 %v500, 0.0
      %v509 = vld [vmem:[%s4] sm:$0xff]
      %v510 = vld [vmem:[%s4 + $0x8] sm:$0xff]
      %v511 = vld [vmem:[%s4 + $0x10] sm:$0xff]
      %v512 = vld [vmem:[%s4 + $0x18] sm:$0xff]
      %v513 = vld [vmem:[%s4 + $0x20] sm:$0xff]
      %v514 = vld [vmem:[%s4 + $0x28] sm:$0xff]
      %v515 = vld [vmem:[%s4 + $0x30] sm:$0xff]
      %v516 = vld [vmem:[%s4 + $0x38] sm:$0xff]
      %v517 = vmul.f32 %v501, %v509
      %v518 = vmul.f32 %v502, %v510
      %v519 = vmul.f32 %v503, %v511
      %v520 = vmul.f32 %v504, %v512
      %v521 = vmul.f32 %v505, %v513
      %v522 = vmul.f32 %v506, %v514
      %v523 = vmul.f32 %v507, %v515
      %v524 = vmul.f32 %v508, %v516
      %v525 = vpack.c.bf16 %v518, %v517
      %v526 = vpack.c.bf16 %v520, %v519
      %v527 = vpack.c.bf16 %v522, %v521
      %v528 = vpack.c.bf16 %v524, %v523
      %v529 = vld [vmem:[%s5] sm:$0xf]
      %v530 = vld [vmem:[%s5 + $0x4] sm:$0xf]
      %v531 = vld [vmem:[%s5 + $0x8] sm:$0xf]
      %v532 = vld [vmem:[%s5 + $0xc] sm:$0xf]
      %v533 = vld [vmem:[%s5 + $0x10] sm:$0xf]
      %v534 = vld [vmem:[%s5 + $0x14] sm:$0xf]
      %v535 = vld [vmem:[%s5 + $0x18] sm:$0xf]
      %v536 = vld [vmem:[%s5 + $0x1c] sm:$0xf]
      %v537 = vld [vmem:[%s5 + $0x20] sm:$0xf]
      %v538 = vld [vmem:[%s5 + $0x24] sm:$0xf]
      %v539 = vld [vmem:[%s5 + $0x28] sm:$0xf]
      %v540 = vld [vmem:[%s5 + $0x2c] sm:$0xf]
      %v541 = vld [vmem:[%s5 + $0x30] sm:$0xf]
      %v542 = vld [vmem:[%s5 + $0x34] sm:$0xf]
      %v543 = vld [vmem:[%s5 + $0x38] sm:$0xf]
      %v544 = vld [vmem:[%s5 + $0x3c] sm:$0xf]
      %v561 = vunpack.c.l.b16 %v529
      %v562 = vunpack.c.l.b16 %v530
      %v563 = vunpack.c.l.b16 %v531
      %v564 = vunpack.c.l.b16 %v532
      %v565 = vunpack.c.l.b16 %v533
      %v566 = vunpack.c.l.b16 %v534
      %v567 = vunpack.c.l.b16 %v535
      %v568 = vunpack.c.l.b16 %v536
      %v569 = vunpack.c.l.b16 %v537
      %v570 = vunpack.c.l.b16 %v538
      %v571 = vunpack.c.l.b16 %v539
      %v572 = vunpack.c.l.b16 %v540
      %v573 = vunpack.c.l.b16 %v541
      %v574 = vunpack.c.l.b16 %v542
      %v575 = vunpack.c.l.b16 %v543
      %v576 = vunpack.c.l.b16 %v544
      %v577 = vpack.c.b16 %v562, %v561
      %v578 = vpack.c.b16 %v564, %v563
      %v579 = vpack.c.b16 %v566, %v565
      %v580 = vpack.c.b16 %v568, %v567
      %v581 = vpack.c.b16 %v570, %v569
      %v582 = vpack.c.b16 %v572, %v571
      %v583 = vpack.c.b16 %v574, %v573
      %v584 = vpack.c.b16 %v576, %v575
      %593 = vmatprep.subr.bf16.mxu0 0
      %594 = vmatpush1.bf16.msra.mxu0 %v577
      %595 = vmatprep.subr.bf16.mxu0 0
      %596 = vmatpush1.bf16.msra.mxu0 %v578
      %597 = vmatprep.subr.bf16.mxu0 0
      %598 = vmatpush1.bf16.msra.mxu0 %v579
      %599 = vmatprep.subr.bf16.mxu0 0
      %600 = vmatpush1.bf16.msra.mxu0 %v580
      %601 = vmatprep.subr.bf16.mxu0 0
      %602 = vmatpush1.bf16.msra.mxu0 %v581
      %603 = vmatprep.subr.bf16.mxu0 0
      %604 = vmatpush1.bf16.msra.mxu0 %v582
      %605 = vmatprep.subr.bf16.mxu0 0
      %606 = vmatpush1.bf16.msra.mxu0 %v583
      %607 = vmatprep.subr.bf16.mxu0 0
      %608 = vmatpush1.bf16.msra.mxu0 %v584
      %609 = vmatprep.subr.bf16.mxu0 0
      %610 = vmatpush1.bf16.msra.mxu0 0
      %611 = vmatprep.subr.bf16.mxu0 0
      %612 = vmatpush1.bf16.msra.mxu0 0
      %613 = vmatprep.subr.bf16.mxu0 0
      %614 = vmatpush1.bf16.msra.mxu0 0
      %615 = vmatprep.subr.bf16.mxu0 0
      %616 = vmatpush1.bf16.msra.mxu0 0
      %617 = vmatprep.subr.bf16.mxu0 0
      %618 = vmatpush1.bf16.msra.mxu0 0
      %619 = vmatprep.subr.bf16.mxu0 0
      %620 = vmatpush1.bf16.msra.mxu0 0
      %621 = vmatprep.subr.bf16.mxu0 0
      %622 = vmatpush1.bf16.msra.mxu0 0
      %623 = vmatprep.subr.bf16.mxu0 0
      %624 = vmatpush1.bf16.msra.mxu0 0
      %625 = vmatprep.mubr.bf16.mxu0 0
      %626 = vmatmul.mubr.bf16.gmra.mrb[0].mxu0 %v525
      %v627 = vpop.f32.mrb[0].mxu0
      %v628 = vadd.f32 0.0, %v627
      %v629 = vpop.f32.mrb[0].mxu0
      %v630 = vpop.f32.mrb[0].mxu0
      %v631 = vadd.f32 0.0, %v630
      %v632 = vpop.f32.mrb[0].mxu0
      %633 = vmatprep.mubr.bf16.mxu0 0
      %634 = vmatmul.mubr.bf16.gmra.mrb[0].mxu0 %v526
      %v635 = vpop.f32.mrb[0].mxu0
      %v636 = vadd.f32 0.0, %v635
      %v637 = vpop.f32.mrb[0].mxu0
      %v638 = vpop.f32.mrb[0].mxu0
      %v639 = vadd.f32 0.0, %v638
      %v640 = vpop.f32.mrb[0].mxu0
      %641 = vmatprep.mubr.bf16.mxu0 0
      %642 = vmatmul.mubr.bf16.gmra.mrb[0].mxu0 %v527
      %v643 = vpop.f32.mrb[0].mxu0
      %v644 = vadd.f32 0.0, %v643
      %v645 = vpop.f32.mrb[0].mxu0
      %v646 = vpop.f32.mrb[0].mxu0
      %v647 = vadd.f32 0.0, %v646
      %v648 = vpop.f32.mrb[0].mxu0
      %649 = vmatprep.mubr.bf16.mxu0 0
      %650 = vmatmul.mubr.bf16.gmra.mrb[0].mxu0 %v528
      %v651 = vpop.f32.mrb[0].mxu0
      %v652 = vadd.f32 0.0, %v651
      %v653 = vpop.f32.mrb[0].mxu0
      %v654 = vpop.f32.mrb[0].mxu0
      %v655 = vadd.f32 0.0, %v654
      %v656 = vpop.f32.mrb[0].mxu0
      %657 = vdwg.mxu0
      %v658 = vld [vmem:[%s6] sm:$0x1]
      %v660 = vlaneseq
      %v661 = vshrl.u32 %v660, 7
      %v662 = vsub.s32 0, %v661
      %v663 = vrot.slane %v658, %v662
      %v665 = vmul.f32 %v628, %v663
      %v666 = vmul.f32 %v631, %v663
      %v667 = vmul.f32 %v636, %v663
      %v668 = vmul.f32 %v639, %v663
      %v669 = vmul.f32 %v644, %v663
      %v670 = vmul.f32 %v647, %v663
      %v671 = vmul.f32 %v652, %v663
      %v672 = vmul.f32 %v655, %v663
      %v673 = vld [vmem:[%s7] sm:$0x1]
      %v675 = vlaneseq
      %v676 = vshrl.u32 %v675, 7
      %v677 = vsub.s32 0, %v676
      %v678 = vrot.slane %v673, %v677
      %v680 = vadd.f32 %v665, %v678
      %v681 = vadd.f32 %v666, %v678
      %v682 = vadd.f32 %v667, %v678
      %v683 = vadd.f32 %v668, %v678
      %v684 = vadd.f32 %v669, %v678
      %v685 = vadd.f32 %v670, %v678
      %v686 = vadd.f32 %v671, %v678
      %v687 = vadd.f32 %v672, %v678
      %v688 = vmax.f32 %v680, 0.0
      %v689 = vmax.f32 %v681, 0.0
      %v690 = vmax.f32 %v682, 0.0
      %v691 = vmax.f32 %v683, 0.0
      %v692 = vmax.f32 %v684, 0.0
      %v693 = vmax.f32 %v685, 0.0
      %v694 = vmax.f32 %v686, 0.0
      %v695 = vmax.f32 %v687, 0.0
      %696 = vst [vmem:[%s307] sm:$0xff] %v688
      %697 = vst [vmem:[%s307 + $0x8] sm:$0xff] %v689
      %698 = vst [vmem:[%s307 + $0x10] sm:$0xff] %v690
      %699 = vst [vmem:[%s307 + $0x18] sm:$0xff] %v691
      %700 = vst [vmem:[%s307 + $0x20] sm:$0xff] %v692
      %701 = vst [vmem:[%s307 + $0x28] sm:$0xff] %v693
      %702 = vst [vmem:[%s307 + $0x30] sm:$0xff] %v694
      %703 = vst [vmem:[%s307 + $0x38] sm:$0xff] %v695
      %s704 = smul.u32 8, %s19
      %p705 = scmp.lt.s32.totalorder %s704, 15
      %s706 = scalar_select %p705, %s704, 15
      %s707 = smul.addr %s706, 8
      %s708 = scalar_lea.vmem %s8, %s707
      // Predicated region
      $region53: #{down_forward.1} parent=51 // pred_check
        %p709 = pneg %p210
      $region54: #{down_forward.1} parent=51 // pred_check_branch
        %711 = sbr.rel (%p709) target = $region56
      $region55: #{down_forward.1} parent=51 // pred_region
        %s712 = smul.u32 8, %s19
      $region56: #{down_forward.1} parent=51 // pred_fallthru
        _
    $region52: #{down_forward.1} parent=5 // pred_fallthru
      _
    %p713 = scmp.le.s32.totalorder 2, %s14
    // Predicated region
    $region57: #{down_forward.1} parent=5 // pred_check
      %p714 = pneg %p713
    $region58: #{down_forward.1} parent=5 // pred_check_branch
      %716 = sbr.rel (%p714) target = $region60
    $region59: #{down_forward.1} parent=5 // pred_region
      %s717 = ssub.s32 %s14, 2
      // Predicated region
      $region61: #{down_forward.1} parent=59 // pred_check
        %p718 = pneg %p216
      $region62: #{down_forward.1} parent=59 // pred_check_branch
        %720 = sbr.rel (%p718) target = $region64
      $region63: #{down_forward.1} parent=59 // pred_region
        %s721 = smul.u32 8, %s20
        %p722 = scmp.lt.s32.totalorder %s721, 15
        %s723 = scalar_select %p722, %s721, 15
        %s724 = smul.addr %s723, 8
        %s725 = scalar_lea.vmem %s8, %s724
      $region64: #{down_forward.1} parent=59 // pred_fallthru
        _
    $region60: #{down_forward.1} parent=5 // pred_fallthru
      _
  $region6: #{down_forward.1} parent=0 // loop_footer
    %s18 = sadd.s32 1, %s14
  $region7: #{down_forward.1} parent=0 // loop_footer_branch
    %13 = sbr.rel target = $region3
  $region8: #{down_forward.1} parent=0 // loop_exit
    _

</llo_original>
